<compile_context>
chip_gen: v6e
topology: v6e:2x2x1
jax: 0.10.0
libtpu: 0.0.40
codegen_flags: <defaults>
</compile_context>

<pallas_src>
import jax
import jax.numpy as jnp
from jax import lax
from jax.experimental import pallas as pl
from jax.experimental.pallas import tpu as pltpu


def _gather_kernel(idx_ref, anchors_ref, out_ref, acc_ref):
    """One grid step over a tile of the anchor axis.

    idx_ref     : VMEM (counts_p, 1) int32   selected anchor indices (global ids)
    anchors_ref : VMEM (tA, N)       float   tile of anchors, rows = anchor id
    out_ref     : VMEM (counts_p, N) float   gathered proposals (lane-folded)
    acc_ref     : VMEM (counts_p, N) f32     accumulator scratch across A tiles
    """
    a_step = pl.program_id(0)
    counts_p = out_ref.shape[0]
    tA = anchors_ref.shape[0]

    @pl.when(a_step == 0)
    def _():
        acc_ref[...] = jnp.zeros_like(acc_ref)

    # Global anchor row-id for every column of this tile.
    local_ids = lax.broadcasted_iota(jnp.int32, (counts_p, tA), 1)
    global_ids = local_ids + a_step * tA

    # One-hot selection matrix built on the VPU, contracted on the MXU.
    onehot = (global_ids == idx_ref[...]).astype(anchors_ref.dtype)
    acc_ref[...] += jnp.dot(onehot, anchors_ref[...],
                            preferred_element_type=jnp.float32)

    @pl.when(a_step == pl.num_programs(0) - 1)
    def _():
        out_ref[...] = acc_ref[...].astype(out_ref.dtype)


def random_proposal_gather(anchors, index, *, max_anchor_tile=2048):
    """anchors: [batch, A, 4] float; index: [counts] int -> [batch, counts, 4]."""
    batch, A, C = anchors.shape
    counts = index.shape[0]
    dtype = anchors.dtype
    N = batch * C

    # ---- wrapper-side layout plumbing (pure XLA reshapes/pads) -------------
    # [batch, A, C] -> [A, batch*C]: gather axis on sublanes, batches+coords
    # folded into lanes so a single matmul serves every batch element.
    anchors_t = jnp.transpose(anchors, (1, 0, 2)).reshape(A, N)

    # Pad counts to a multiple of 8 (sublane granularity); padded index rows
    # are 0 and are sliced off afterwards.
    counts_p = max(8, ((counts + 7) // 8) * 8)
    idx_p = jnp.zeros((counts_p, 1), jnp.int32).at[:counts, 0].set(
        index.astype(jnp.int32))

    # Tile the anchor axis so large A never blows VMEM (rows pad to 128 lanes:
    # ~tA*512 B per buffer).  Pad A with zero rows so tiles divide evenly;
    # padded rows can never be selected, so they contribute nothing.
    tA = min(((A + 7) // 8) * 8, max_anchor_tile)
    A_pad = ((A + tA - 1) // tA) * tA
    if A_pad != A:
        anchors_t = jnp.pad(anchors_t, ((0, A_pad - A), (0, 0)))

    grid = (A_pad // tA,)

    out = pl.pallas_call(
        _gather_kernel,
        out_shape=jax.ShapeDtypeStruct((counts_p, N), dtype),
        grid_spec=pltpu.PrefetchScalarGridSpec(
            num_scalar_prefetch=0,
            grid=grid,
            in_specs=[
                pl.BlockSpec((counts_p, 1), lambda a: (0, 0)),
                pl.BlockSpec((tA, N), lambda a: (a, 0)),
            ],
            out_specs=pl.BlockSpec((counts_p, N), lambda a: (0, 0)),
            scratch_shapes=[pltpu.VMEM((counts_p, N), jnp.float32)],
        ),
        compiler_params=pltpu.CompilerParams(
            dimension_semantics=("arbitrary",)),  # A axis is a reduction
    )(idx_p, anchors_t)

    # [counts_p, batch*C] -> [batch, counts, C]
    out = out[:counts].reshape(counts, batch, C).transpose(1, 0, 2)
    return out


def random_proposal_layer_forward(feature_maps, anchors, counts, key):
    """JAX/Pallas equivalent of RandomProposalLayer.forward.

    feature_maps : list of NCHW feature maps (only batch size is consumed)
    anchors      : list; anchors[0] is [batch, A, 4] or [A, 4] (normalized)
    counts       : number of proposals to randomly select
    key          : jax PRNG key.  Replaces np.random.choice(..., replace=False);
                   same semantics (sample w/o replacement), different RNG stream.
    """
    fmap = feature_maps[0]
    anc = anchors[0]
    batches = fmap.shape[0]

    if anc.ndim == 3:
        assert anc.shape[0] == batches, "the batch num must match, fmap & anchors"
    elif anc.ndim == 2:
        anc = jnp.broadcast_to(anc[None, :, :], (batches,) + anc.shape)
    else:
        raise ValueError("anchors dimensions wrong...")

    anchors_num = anc.shape[1]
    assert counts <= anchors_num, "cannot sample more proposals than anchors"
    # sample-without-replacement (host/JAX glue, as in the reference forward)
    index = jax.random.permutation(key, anchors_num)[:counts].astype(jnp.int32)

    proposals = random_proposal_gather(anc, index)
    return [proposals], index  # index returned for reference check


if __name__ == "__main__":
    key = jax.random.PRNGKey(0)
    k_fmap, k_anchor, k_sel = jax.random.split(key, 3)

    # Module config (synthetic, deterministic):
    counts = 8
    image_shape = (16, 16)   # unused in forward, kept for parity with __init__
    levels = [2]             # unused in forward, kept for parity with __init__

    batch, chans, H, W = 2, 4, 16, 16
    anchors_per_image = 32

    # NCHW feature map (only batch dim is consumed by the forward pass)
    feature_map = jax.random.normal(k_fmap, (batch, chans, H, W),
                                    dtype=jnp.float32)
    # normalized anchors [batch, A, (y1, x1, y2, x2)]
    anchors = jax.random.uniform(k_anchor, (batch, anchors_per_image, 4),
                                 dtype=jnp.float32)

    (proposals_list, index) = random_proposal_layer_forward(
        [feature_map], [anchors], counts, k_sel)
    proposals = proposals_list[0]
    proposals = jax.block_until_ready(proposals)

    # Reference semantics: torch.gather(anchors, dim=1, index=...) == anchors[:, index, :]
    ref = anchors[:, index, :]
    assert proposals.shape == (batch, counts, 4), proposals.shape
    assert proposals.dtype == anchors.dtype
    assert jnp.allclose(proposals, ref), "mismatch vs reference gather"

    print("KERNEL_OK")
</pallas_src>

<mosaic_0001>
module attributes {stable_mosaic.version = 11 : i64} {
  func.func @_gather_kernel(%arg0: i32, %arg1: memref<8x1xi32, #tpu.memory_space<vmem>>, %arg2: memref<32x8xf32, #tpu.memory_space<vmem>>, %arg3: memref<8x8xf32, #tpu.memory_space<vmem>>, %arg4: memref<8x8xf32, #tpu.memory_space<vmem>>) attributes {dimension_semantics = [#tpu.dimension_semantics<arbitrary>], iteration_bounds = array<i64: 1>, scalar_prefetch = 0 : i64, scratch_operands = 1 : i64, tpu.core_type = #tpu.core_type<tc>, window_params = [{pipeline_mode = #tpu.pipeline_mode<synchronous>, transform_indices = @transform_0, window_bounds = array<i64: 8, 1>}, {transform_indices = @transform_1, window_bounds = array<i64: 32, 8>}, {pipeline_mode = #tpu.pipeline_mode<synchronous>, transform_indices = @transform_2, window_bounds = array<i64: 8, 8>}]} {
    %c0_i32 = arith.constant 0 : i32
    %0 = arith.cmpi eq, %arg0, %c0_i32 : i32
    %1 = arith.extui %0 : i1 to i32
    %c0_i32_0 = arith.constant 0 : i32
    %2 = arith.cmpi ne, %1, %c0_i32_0 : i32
    scf.if %2 {
      %cst_10 = arith.constant 0.000000e+00 : f32
      %20 = vector.broadcast %cst_10 : f32 to vector<8x8xf32>
      %c0_11 = arith.constant 0 : index
      %c0_12 = arith.constant 0 : index
      %21 = vector.load %arg4[%c0_11, %c0_12] : memref<8x8xf32, #tpu.memory_space<vmem>>, vector<8x8xf32>
      tpu.vector_store %arg4[%c0_11, %c0_12], %20 {strides = array<i32>} : memref<8x8xf32, #tpu.memory_space<vmem>>, vector<8x8xf32>,
    } else {
    }
    %3 = tpu.iota {dimensions = array<i32: 1>} : vector<8x32xi32>
    %c32_i32 = arith.constant 32 : i32
    %4 = arith.muli %arg0, %c32_i32 : i32
    %5 = vector.broadcast %4 : i32 to vector<8x32xi32>
    %6 = arith.addi %3, %5 : vector<8x32xi32>
    %c0 = arith.constant 0 : index
    %c0_1 = arith.constant 0 : index
    %7 = vector.load %arg1[%c0, %c0_1] : memref<8x1xi32, #tpu.memory_space<vmem>>, vector<8x1xi32>
    %8 = vector.broadcast %7 : vector<8x1xi32> to vector<8x32xi32>
    %9 = arith.cmpi eq, %6, %8 : vector<8x32xi32>
    %10 = arith.extui %9 : vector<8x32xi1> to vector<8x32xi32>
    %11 = arith.sitofp %10 : vector<8x32xi32> to vector<8x32xf32>
    %c0_2 = arith.constant 0 : index
    %c0_3 = arith.constant 0 : index
    %12 = vector.load %arg4[%c0_2, %c0_3] : memref<8x8xf32, #tpu.memory_space<vmem>>, vector<8x8xf32>
    %c0_4 = arith.constant 0 : index
    %c0_5 = arith.constant 0 : index
    %13 = vector.load %arg2[%c0_4, %c0_5] : memref<32x8xf32, #tpu.memory_space<vmem>>, vector<32x8xf32>
    %cst = arith.constant dense<0.000000e+00> : vector<8x8xf32>
    %14 = tpu.matmul %11, %13, %cst {dimension_numbers = #tpu.dot_dimension_numbers<[1], [0], [0], [1], [0, 0, 1, 1], [], []>} : vector<8x32xf32>, vector<32x8xf32>, vector<8x8xf32> -> vector<8x8xf32>
    %15 = arith.addf %12, %14 : vector<8x8xf32>
    %c0_6 = arith.constant 0 : index
    %c0_7 = arith.constant 0 : index
    %16 = vector.load %arg4[%c0_6, %c0_7] : memref<8x8xf32, #tpu.memory_space<vmem>>, vector<8x8xf32>
    tpu.vector_store %arg4[%c0_6, %c0_7], %15 {strides = array<i32>} : memref<8x8xf32, #tpu.memory_space<vmem>>, vector<8x8xf32>,
    %c0_i32_8 = arith.constant 0 : i32
    %17 = arith.cmpi eq, %arg0, %c0_i32_8 : i32
    %18 = arith.extui %17 : i1 to i32
    %c0_i32_9 = arith.constant 0 : i32
    %19 = arith.cmpi ne, %18, %c0_i32_9 : i32
    scf.if %19 {
      %c0_10 = arith.constant 0 : index
      %c0_11 = arith.constant 0 : index
      %20 = vector.load %arg4[%c0_10, %c0_11] : memref<8x8xf32, #tpu.memory_space<vmem>>, vector<8x8xf32>
      %c0_12 = arith.constant 0 : index
      %c0_13 = arith.constant 0 : index
      %21 = vector.load %arg3[%c0_12, %c0_13] : memref<8x8xf32, #tpu.memory_space<vmem>>, vector<8x8xf32>
      tpu.vector_store %arg3[%c0_12, %c0_13], %20 {strides = array<i32>} : memref<8x8xf32, #tpu.memory_space<vmem>>, vector<8x8xf32>,
    } else {
    }
    return
  }
  func.func @transform_0(%arg0: i32) -> (i32, i32) {
    %c0_i32 = arith.constant 0 : i32
    %c0_i32_0 = arith.constant 0 : i32
    %c0_i32_1 = arith.constant 0 : i32
    return %c0_i32, %c0_i32_0 : i32, i32
  }
  func.func @transform_1(%arg0: i32) -> (i32, i32) {
    %c0_i32 = arith.constant 0 : i32
    %c0_i32_0 = arith.constant 0 : i32
    return %arg0, %c0_i32 : i32, i32
  }
  func.func @transform_2(%arg0: i32) -> (i32, i32) {
    %c0_i32 = arith.constant 0 : i32
    %c0_i32_0 = arith.constant 0 : i32
    %c0_i32_1 = arith.constant 0 : i32
    return %c0_i32, %c0_i32_0 : i32, i32
  }
}

</mosaic_0001>

<llo_original>
// kernel: tpu_custom_call.1
$region0: #{tpu_custom_call.1}
  #allocation0 [shape = 'u32[]', space=smem, size = 0x4, offset = 0x4, fixed_abs, tag = 'smem constant byte address 0x4 - core index']
  #allocation1 [shape = 'u32[144,128]{1,0:T(1,128)}', space=vmem, size = 0x12000, scoped, tag = 'internal scratch']
  #allocation2 [shape = 'f32[8,8]{1,0:T(8,128)}', space=vmem, size = 0x1000, scoped, tag = 'scratch operand']
  %s0 = inlined_call_operand.vmem [shape: s32[8,1], index: 0, kind: input, shape index: {}]
  %s1 = inlined_call_operand.vmem [shape: f32[32,8], index: 1, kind: input, shape index: {}]
  %s2 = inlined_call_operand.hbm [shape: f32[8,8], index: 2, kind: output, shape index: {}]
  %s3 = sld [smem:[#allocation0]]
  $region26: #{tpu_custom_call.1} parent=0
    _
  %s5 = ssub.s32 1, %s3
  %s6 = scalar_select 0, %s5, %s3
  $region1: #{tpu_custom_call.1} parent=0
    #allocation3 [shape = 'u8[4096]{0}', space=vmem, size = 0x1000, scoped, tag = 'output window, operand 0, single buffered']
    #allocation4 [shape = 's32[1]{0}', space=sflag, size = 0x4, scoped, tag = 'scoped memory for tpu_custom_call.1']
    %7 = vsyncpa [#allocation4], 0
    // Predicated region
    $region2: #{tpu_custom_call.1} parent=1 // pred_check
      _
    $region3: #{tpu_custom_call.1} parent=1 // pred_check_branch
      %9 = sbr.rel (0) target = $region5
    $region4: #{tpu_custom_call.1} parent=1 // pred_region
      _
    $region5: #{tpu_custom_call.1} parent=1 // pred_fallthru
      _
    // Predicated region
    $region6: #{tpu_custom_call.1} parent=1 // pred_check
      _
    $region7: #{tpu_custom_call.1} parent=1 // pred_check_branch
      %11 = sbr.rel (0) target = $region9
    $region8: #{tpu_custom_call.1} parent=1 // pred_region
      _
    $region9: #{tpu_custom_call.1} parent=1 // pred_fallthru
      _
    %p12 = scmp.eq.s32.totalorder 0, 0
    // Predicated region
    $region10: #{tpu_custom_call.1} parent=1 // pred_check
      %p13 = pneg %p12
    $region11: #{tpu_custom_call.1} parent=1 // pred_check_branch
      %15 = sbr.rel (%p13) target = $region13
    $region12: #{tpu_custom_call.1} parent=1 // pred_region
      %vm16 = vcmask 64512
      %17 = vst.msk [vmem:[#allocation2] sm:$0xff] %vm16, 0.0
    $region13: #{tpu_custom_call.1} parent=1 // pred_fallthru
      _
    %v18 = vlaneseq
    %v19 = vand.u32 %v18, 127
    %s20 = smul.u32 0, 32
    %v21 = vstv %s20
    %v22 = vadd.s32 %v19, %v21
    %v23 = vld [vmem:[%s0] sm:$0xff]
    %24 = vset.pattern.permute.xlu0 0
    %25 = vperm.xlu0 %24, %v23
    %v26 = vpop.permute.xlu0 %25
    %vm27 = vcmp.eq.s32.totalorder %v22, %v26
    %v28 = vsel %vm27, 1, 0
    %v29 = vcvt.s32.f32 %v28
    %v30 = vld [vmem:[#allocation2] sm:$0xff]
    %v31 = vld [vmem:[%s1] sm:$0xff]
    %v32 = vld [vmem:[%s1 + $0x8] sm:$0xff]
    %v33 = vld [vmem:[%s1 + $0x10] sm:$0xff]
    %v34 = vld [vmem:[%s1 + $0x18] sm:$0xff]
    %vm35 = vcmask 261120
    %v37 = vsel %vm35, %v29, 0
    %39 = vmatprep.subr.mxu0 0.0
    %40 = vmatpush1.msra.mxu0 0.0
    %41 = vmatprep.subr.mxu0 0.0
    %42 = vmatpush1.msra.mxu0 0.0
    %43 = vmatprep.subr.mxu0 0.0
    %44 = vmatpush1.msra.mxu0 0.0
    %45 = vmatprep.subr.mxu0 0.0
    %46 = vmatpush1.msra.mxu0 0.0
    %47 = vmatprep.subr.mxu0 0.0
    %48 = vmatpush1.msra.mxu0 0.0
    %49 = vmatprep.subr.mxu0 0.0
    %50 = vmatpush1.msra.mxu0 0.0
    %51 = vmatprep.subr.mxu0 0.0
    %52 = vmatpush1.msra.mxu0 0.0
    %53 = vmatprep.subr.mxu0 0.0
    %54 = vmatpush1.msra.mxu0 0.0
    %55 = vmatprep.subr.mxu0 0.0
    %56 = vmatpush1.msra.mxu0 0.0
    %57 = vmatprep.subr.mxu0 0.0
    %58 = vmatpush1.msra.mxu0 0.0
    %59 = vmatprep.subr.mxu0 0.0
    %60 = vmatpush1.msra.mxu0 0.0
    %61 = vmatprep.subr.mxu0 0.0
    %62 = vmatpush1.msra.mxu0 0.0
    %63 = vmatprep.subr.mxu0 0.0
    %64 = vmatpush1.msra.mxu0 %v34
    %65 = vmatprep.subr.mxu0 0.0
    %66 = vmatpush1.msra.mxu0 %v33
    %67 = vmatprep.subr.mxu0 0.0
    %68 = vmatpush1.msra.mxu0 %v32
    %69 = vmatprep.subr.mxu0 0.0
    %70 = vmatpush1.msra.mxu0 %v31
    %71 = vmatprep.subr.mxu0 0.0
    %72 = vmatpush2.msra.mxu0 0.0
    %73 = vmatprep.subr.mxu0 0.0
    %74 = vmatpush2.msra.mxu0 0.0
    %75 = vmatprep.subr.mxu0 0.0
    %76 = vmatpush2.msra.mxu0 0.0
    %77 = vmatprep.subr.mxu0 0.0
    %78 = vmatpush2.msra.mxu0 0.0
    %79 = vmatprep.subr.mxu0 0.0
    %80 = vmatpush2.msra.mxu0 0.0
    %81 = vmatprep.subr.mxu0 0.0
    %82 = vmatpush2.msra.mxu0 0.0
    %83 = vmatprep.subr.mxu0 0.0
    %84 = vmatpush2.msra.mxu0 0.0
    %85 = vmatprep.subr.mxu0 0.0
    %86 = vmatpush2.msra.mxu0 0.0
    %87 = vmatprep.subr.mxu0 0.0
    %88 = vmatpush2.msra.mxu0 0.0
    %89 = vmatprep.subr.mxu0 0.0
    %90 = vmatpush2.msra.mxu0 0.0
    %91 = vmatprep.subr.mxu0 0.0
    %92 = vmatpush2.msra.mxu0 0.0
    %93 = vmatprep.subr.mxu0 0.0
    %94 = vmatpush2.msra.mxu0 0.0
    %95 = vmatprep.subr.mxu0 0.0
    %96 = vmatpush2.msra.mxu0 0.0
    %97 = vmatprep.subr.mxu0 0.0
    %98 = vmatpush2.msra.mxu0 0.0
    %99 = vmatprep.subr.mxu0 0.0
    %100 = vmatpush2.msra.mxu0 0.0
    %101 = vmatprep.subr.mxu0 0.0
    %102 = vmatpush2.msra.mxu0 0.0
    %103 = vmatprep.mubr.f32.mxu0 0.0
    %104 = vmatmul.mubr.f32.gmra.mxu0 %v37
    %v105 = vpop.f32.mrf.mxu0
    %v106 = vadd.f32 0.0, %v105
    %v107 = vpop.f32.mrf.mxu0
    %108 = vdwg.mxu0
    %v109 = vadd.f32 %v30, %v106
    %vm110 = vcmask 64512
    %111 = vst.msk [vmem:[#allocation2] sm:$0xff] %vm110, %v109
    // Predicated region
    $region14: #{tpu_custom_call.1} parent=1 // pred_check
      %p112 = pneg %p12
    $region15: #{tpu_custom_call.1} parent=1 // pred_check_branch
      %114 = sbr.rel (%p112) target = $region17
    $region16: #{tpu_custom_call.1} parent=1 // pred_region
      %v115 = vld [vmem:[#allocation2] sm:$0xff]
      %116 = vst.msk [vmem:[#allocation3] sm:$0xff] %vm110, %v115
    $region17: #{tpu_custom_call.1} parent=1 // pred_fallthru
      _
    // Predicated region
    $region18: #{tpu_custom_call.1} parent=1 // pred_check
      _
    $region19: #{tpu_custom_call.1} parent=1 // pred_check_branch
      %118 = sbr.rel (0) target = $region21
    $region20: #{tpu_custom_call.1} parent=1 // pred_region
      %s120 = ssub.s32 128, 128
      %121 = vsyncadd [#allocation4], %s120
      %s123 = sshll.u32 [#allocation3], 4
      %s124 = int_to_ptr.vmem [resolvable:$true] %s123
      %126 = dma.vmem_to_hbm [thread:$0]  %s124, 128, %s2, [#allocation4]
    $region21: #{tpu_custom_call.1} parent=1 // pred_fallthru
      _
    // Predicated region
    $region22: #{tpu_custom_call.1} parent=1 // pred_check
      _
    $region23: #{tpu_custom_call.1} parent=1 // pred_check_branch
      %128 = sbr.rel (0) target = $region25
    $region24: #{tpu_custom_call.1} parent=1 // pred_region
      %129 = dma.done [#allocation4], 128
    $region25: #{tpu_custom_call.1} parent=1 // pred_fallthru
      _
    %130 = vsyncpa [#allocation4], 1

</llo_original>
